<compile_context>
chip_gen: v6e
topology: v6e:2x2x1
jax: 0.10.0
libtpu: 0.0.40
codegen_flags: <defaults>
</compile_context>

<pallas_src>
import jax
import jax.numpy as jnp
from jax.experimental import pallas as pl
from jax.experimental.pallas import tpu as pltpu


def _linear1_fma(x, w1, b1):
    """First conv (kernel_size=1) as C_in broadcast-FMAs on the VPU.

    x: (C_in, TN) f32, w1: (F, C_in) f32, b1: (F, 1) f32  ->  (F, TN) f32.
    K = C_in is tiny (3), so the MXU would be almost entirely wasted on it.
    """
    c_in = x.shape[0]
    h = w1[:, 0:1] * x[0:1, :]
    for c in range(1, c_in):
        h = h + w1[:, c:c + 1] * x[c:c + 1, :]
    return h + b1


def _apply_kernel(x_ref, w1_ref, b1_ref, w2_ref, b2_ref, o_ref):
    """conv1 (BN pre-folded into w1/b1) -> ReLU -> conv2, stores (1, F, TN)."""
    x = x_ref[0].astype(jnp.float32)                    # (C_in, TN)
    h = _linear1_fma(x, w1_ref[...], b1_ref[...])       # (F, TN), already BN'd
    h = jnp.maximum(h, 0.0)                             # ReLU only (BN folded away)
    # Second conv on the MXU: bf16 operands, f32 accumulation.
    y = jnp.dot(w2_ref[...], h.astype(jnp.bfloat16),
                preferred_element_type=jnp.float32)     # (F, TN)
    o_ref[0] = (y + b2_ref[...]).astype(o_ref.dtype)


def _chip_vmem_bytes():
    """Physical VMEM of the current chip; conservative fallback if unavailable."""
    try:
        info = pltpu.get_tpu_info()
        return int(getattr(info, "vmem_capacity_bytes"))
    except Exception:
        return 64 * 1024 * 1024      # v7x per-TC VMEM (smallest of the fleet)


def _pick_point_tile(n, f, out_bytes_per_elem):
    """Lane-dense point tile: multiple of 128, capped so the (F, TN) output tile
    stays <= ~2 MiB (double-buffering then fits comfortably in v7x's 64 MiB)."""
    cap = 128
    while (cap * 2 <= 2048
           and cap * 2 * f * max(out_bytes_per_elem, 4) <= 2 * 1024 * 1024):
        cap *= 2
    n_128 = ((n + 127) // 128) * 128          # round N up to a lane multiple
    return min(cap, n_128)


def position_embedding_learned(xyz, params, out_dtype=jnp.float32):
    """xyz: (B, N, C_in) -> (B, F, N), matching the PyTorch module (training BN)."""
    w1, b1, gamma, beta, w2, b2 = params
    B, N, C_in = xyz.shape
    F = w1.shape[0]
    eps = 1e-5
    M = B * N

    # ---- BatchNorm statistics from the tiny x moments (no extra kernel pass) ----
    # h = W1·x + b1 is linear in x, so:
    #   mean_h = W1·mean_x + b1,   var_h = diag(W1 · cov_x · W1ᵀ)   (biased cov).
    x2d = xyz.reshape(M, C_in).astype(jnp.float32)
    mean_x = jnp.mean(x2d, axis=0)                               # (C_in,)
    xc = x2d - mean_x
    cov_x = (xc.T @ xc) / jnp.float32(M)                         # (C_in, C_in)
    mean_h = w1 @ mean_x + b1[:, 0]                              # (F,)
    var_h = jnp.maximum(jnp.sum((w1 @ cov_x) * w1, axis=1), 0.0)  # (F,)

    # Fold BN affine into the first conv: W1' = s·W1, b1' = s·b1 + t.
    s = gamma[:, 0] * jax.lax.rsqrt(var_h + eps)                 # (F,)
    t = beta[:, 0] - mean_h * s                                  # (F,)
    w1_f = w1 * s[:, None]                                       # (F, C_in)
    b1_f = (b1[:, 0] * s + t)[:, None]                           # (F, 1)

    # ---- Layout + padding: NCL with points lane-dense, N padded to the tile ----
    out_bytes = jnp.dtype(out_dtype).itemsize
    TN = _pick_point_tile(N, F, out_bytes)
    N_pad = ((N + TN - 1) // TN) * TN
    # TODO(synk): the transpose/pad materializes a (B, C_in, N_pad) copy in HBM;
    # allow_input_fusion could fuse it into the input DMA but is left off for safety.
    x_ncl = jnp.transpose(xyz, (0, 2, 1)).astype(jnp.float32)    # (B, C_in, N)
    if N_pad != N:
        x_ncl = jnp.pad(x_ncl, ((0, 0), (0, 0), (0, N_pad - N)))

    grid = (B, N_pad // TN)
    x_spec = pl.BlockSpec((1, C_in, TN), lambda b, t: (b, 0, t))
    # Parameters: constant block index -> VMEM-resident across all grid steps.
    const = lambda shape: pl.BlockSpec(shape, lambda b, t: tuple(0 for _ in shape))

    # VMEM budget: double-buffered x tile + output tile + params, capped by chip.
    tile_bytes = C_in * TN * 4 + F * TN * max(out_bytes, 4)
    param_bytes = (F * C_in + F + F) * 4 + F * F * 2
    need = 2 * tile_bytes + 2 * param_bytes + (2 << 20)
    chip_vmem = _chip_vmem_bytes()
    vmem_limit = int(min(max(need, 4 << 20), max(chip_vmem - (16 << 20), 16 << 20)))

    M_pad = B * N_pad
    apply_cost = pl.CostEstimate(
        flops=2 * M_pad * F * (C_in + F) + 2 * M_pad * F,
        transcendentals=0,
        bytes_accessed=M_pad * C_in * 4 + M_pad * F * out_bytes + param_bytes)

    out = pl.pallas_call(
        _apply_kernel,
        out_shape=jax.ShapeDtypeStruct((B, F, N_pad), out_dtype),
        grid=grid,
        in_specs=[
            x_spec,
            const((F, C_in)),   # W1 (BN-folded)
            const((F, 1)),      # b1 (BN-folded)
            const((F, F)),      # W2 (bf16)
            const((F, 1)),      # b2
        ],
        out_specs=pl.BlockSpec((1, F, TN), lambda b, t: (b, 0, t)),
        compiler_params=pltpu.CompilerParams(
            dimension_semantics=("parallel", "parallel"),
            vmem_limit_bytes=vmem_limit),
        cost_estimate=apply_cost,
    )(x_ncl, w1_f, b1_f, w2.astype(jnp.bfloat16), b2)

    if N_pad != N:
        out = out[:, :, :N]
    return out


def init_params(key, input_channel, num_pos_feats):
    """Deterministic synthetic parameters (shapes match the nn.Module)."""
    k1, k2, k3, k4 = jax.random.split(key, 4)
    # Conv1d(C_in, F, 1): weight (F, C_in, 1) -> (F, C_in); bias (F,) -> (F, 1)
    w1 = jax.random.normal(k1, (num_pos_feats, input_channel), jnp.float32) * 0.1
    b1 = jax.random.normal(k2, (num_pos_feats, 1), jnp.float32) * 0.01
    # BatchNorm1d(F): gamma=1, beta=0 (PyTorch default init)
    gamma = jnp.ones((num_pos_feats, 1), jnp.float32)
    beta = jnp.zeros((num_pos_feats, 1), jnp.float32)
    # Conv1d(F, F, 1): weight (F_out, F_in, 1) -> (F_out, F_in)
    w2 = jax.random.normal(k3, (num_pos_feats, num_pos_feats), jnp.float32) * 0.1
    b2 = jax.random.normal(k4, (num_pos_feats, 1), jnp.float32) * 0.01
    return (w1, b1, gamma, beta, w2, b2)


if __name__ == "__main__":
    key = jax.random.PRNGKey(0)
    # Small shapes, but lane-aligned point count so the tiled path is exercised.
    B, N, C_in, F = 2, 256, 3, 32

    kx, kp = jax.random.split(key)
    xyz = jax.random.normal(kx, (B, N, C_in), jnp.float32)
    params = init_params(kp, C_in, F)

    out = position_embedding_learned(xyz, params)
    jax.block_until_ready(out)

    # Pure-JAX f32 reference (training-mode BN), flat layout.
    w1, b1, gamma, beta, w2, b2 = params
    x2d = xyz.reshape(B * N, C_in)
    h = x2d @ w1.T + b1[:, 0]
    mu = h.mean(0, keepdims=True)
    var = ((h - mu) ** 2).mean(0, keepdims=True)
    h = (h - mu) / jnp.sqrt(var + 1e-5) * gamma[:, 0] + beta[:, 0]
    h = jnp.maximum(h, 0.0)
    ref = (h @ w2.T + b2[:, 0]).reshape(B, N, F).transpose(0, 2, 1)

    assert out.shape == (B, F, N)
    # Second matmul runs in bf16 (f32 accumulation), so the comparison against
    # the pure-f32 reference uses a slightly looser tolerance.
    assert jnp.allclose(out, ref, atol=2e-2, rtol=2e-2), float(
        jnp.max(jnp.abs(out - ref)))

    # Also exercise a ragged (non-128-multiple) point count through the padded path.
    N2 = 200
    xyz2 = jax.random.normal(jax.random.PRNGKey(1), (B, N2, C_in), jnp.float32)
    out2 = position_embedding_learned(xyz2, params)
    jax.block_until_ready(out2)
    assert out2.shape == (B, F, N2)

    print("KERNEL_OK")
</pallas_src>

<mosaic_0001>
module attributes {stable_mosaic.version = 11 : i64} {
  func.func @_apply_kernel(%arg0: i32, %arg1: i32, %arg2: memref<1x3x256xf32, #tpu.memory_space<vmem>>, %arg3: memref<32x3xf32, #tpu.memory_space<vmem>>, %arg4: memref<32x1xf32, #tpu.memory_space<vmem>>, %arg5: memref<32x32xbf16, #tpu.memory_space<vmem>>, %arg6: memref<32x1xf32, #tpu.memory_space<vmem>>, %arg7: memref<1x32x256xf32, #tpu.memory_space<vmem>>) attributes {dimension_semantics = [#tpu.dimension_semantics<parallel>, #tpu.dimension_semantics<parallel>], iteration_bounds = array<i64: 2, 1>, scalar_prefetch = 0 : i64, scratch_operands = 0 : i64, tpu.core_type = #tpu.core_type<tc>, window_params = [{transform_indices = @transform_0, window_bounds = array<i64: 1, 3, 256>}, {pipeline_mode = #tpu.pipeline_mode<synchronous>, transform_indices = @transform_1, window_bounds = array<i64: 32, 3>}, {pipeline_mode = #tpu.pipeline_mode<synchronous>, transform_indices = @transform_2, window_bounds = array<i64: 32, 1>}, {pipeline_mode = #tpu.pipeline_mode<synchronous>, transform_indices = @transform_3, window_bounds = array<i64: 32, 32>}, {pipeline_mode = #tpu.pipeline_mode<synchronous>, transform_indices = @transform_4, window_bounds = array<i64: 32, 1>}, {transform_indices = @transform_5, window_bounds = array<i64: 1, 32, 256>}]} {
    %c0 = arith.constant 0 : index
    %c0_0 = arith.constant 0 : index
    %c0_1 = arith.constant 0 : index
    %0 = vector.load %arg2[%c0, %c0_0, %c0_1] : memref<1x3x256xf32, #tpu.memory_space<vmem>>, vector<1x3x256xf32>
    %1 = vector.shape_cast %0 : vector<1x3x256xf32> to vector<3x256xf32>
    %c0_2 = arith.constant 0 : index
    %c0_3 = arith.constant 0 : index
    %2 = vector.load %arg3[%c0_2, %c0_3] : memref<32x3xf32, #tpu.memory_space<vmem>>, vector<32x3xf32>
    %c0_4 = arith.constant 0 : index
    %c0_5 = arith.constant 0 : index
    %3 = vector.load %arg4[%c0_4, %c0_5] : memref<32x1xf32, #tpu.memory_space<vmem>>, vector<32x1xf32>
    %4 = vector.extract_strided_slice %2 {offsets = [0, 0], sizes = [32, 1], strides = [1, 1]} : vector<32x3xf32> to vector<32x1xf32>
    %5 = vector.extract_strided_slice %1 {offsets = [0, 0], sizes = [1, 256], strides = [1, 1]} : vector<3x256xf32> to vector<1x256xf32>
    %6 = vector.broadcast %4 : vector<32x1xf32> to vector<32x256xf32>
    %7 = vector.broadcast %5 : vector<1x256xf32> to vector<32x256xf32>
    %8 = arith.mulf %6, %7 : vector<32x256xf32>
    %9 = vector.extract_strided_slice %2 {offsets = [0, 1], sizes = [32, 1], strides = [1, 1]} : vector<32x3xf32> to vector<32x1xf32>
    %10 = vector.extract_strided_slice %1 {offsets = [1, 0], sizes = [1, 256], strides = [1, 1]} : vector<3x256xf32> to vector<1x256xf32>
    %11 = vector.broadcast %9 : vector<32x1xf32> to vector<32x256xf32>
    %12 = vector.broadcast %10 : vector<1x256xf32> to vector<32x256xf32>
    %13 = arith.mulf %11, %12 : vector<32x256xf32>
    %14 = arith.addf %8, %13 : vector<32x256xf32>
    %15 = vector.extract_strided_slice %2 {offsets = [0, 2], sizes = [32, 1], strides = [1, 1]} : vector<32x3xf32> to vector<32x1xf32>
    %16 = vector.extract_strided_slice %1 {offsets = [2, 0], sizes = [1, 256], strides = [1, 1]} : vector<3x256xf32> to vector<1x256xf32>
    %17 = vector.broadcast %15 : vector<32x1xf32> to vector<32x256xf32>
    %18 = vector.broadcast %16 : vector<1x256xf32> to vector<32x256xf32>
    %19 = arith.mulf %17, %18 : vector<32x256xf32>
    %20 = arith.addf %14, %19 : vector<32x256xf32>
    %21 = vector.broadcast %3 : vector<32x1xf32> to vector<32x256xf32>
    %22 = arith.addf %20, %21 : vector<32x256xf32>
    %cst = arith.constant 0.000000e+00 : f32
    %23 = vector.broadcast %cst : f32 to vector<32x256xf32>
    %24 = arith.maximumf %22, %23 : vector<32x256xf32>
    %c0_6 = arith.constant 0 : index
    %c0_7 = arith.constant 0 : index
    %25 = vector.load %arg5[%c0_6, %c0_7] : memref<32x32xbf16, #tpu.memory_space<vmem>>, vector<32x32xbf16>
    %26 = arith.truncf %24 : vector<32x256xf32> to vector<32x256xbf16>
    %cst_8 = arith.constant dense<0.000000e+00> : vector<32x256xf32>
    %27 = tpu.matmul %25, %26, %cst_8 {dimension_numbers = #tpu.dot_dimension_numbers<[1], [0], [0], [1], [0, 0, 1, 1], [], []>} : vector<32x32xbf16>, vector<32x256xbf16>, vector<32x256xf32> -> vector<32x256xf32>
    %c0_9 = arith.constant 0 : index
    %c0_10 = arith.constant 0 : index
    %28 = vector.load %arg6[%c0_9, %c0_10] : memref<32x1xf32, #tpu.memory_space<vmem>>, vector<32x1xf32>
    %29 = vector.broadcast %28 : vector<32x1xf32> to vector<32x256xf32>
    %30 = arith.addf %27, %29 : vector<32x256xf32>
    %c0_11 = arith.constant 0 : index
    %c0_12 = arith.constant 0 : index
    %c0_13 = arith.constant 0 : index
    %31 = vector.load %arg7[%c0_11, %c0_12, %c0_13] : memref<1x32x256xf32, #tpu.memory_space<vmem>>, vector<1x32x256xf32>
    %32 = vector.shape_cast %31 : vector<1x32x256xf32> to vector<32x256xf32>
    %33 = vector.shape_cast %30 : vector<32x256xf32> to vector<1x32x256xf32>
    tpu.vector_store %arg7[%c0_11, %c0_12, %c0_13], %33 {strides = array<i32>} : memref<1x32x256xf32, #tpu.memory_space<vmem>>, vector<1x32x256xf32>,
    return
  }
  func.func @transform_0(%arg0: i32, %arg1: i32) -> (i32, i32, i32) {
    %c0_i32 = arith.constant 0 : i32
    %c0_i32_0 = arith.constant 0 : i32
    return %arg0, %c0_i32, %arg1 : i32, i32, i32
  }
  func.func @transform_1(%arg0: i32, %arg1: i32) -> (i32, i32) {
    %c0_i32 = arith.constant 0 : i32
    %c0_i32_0 = arith.constant 0 : i32
    %c0_i32_1 = arith.constant 0 : i32
    return %c0_i32, %c0_i32_0 : i32, i32
  }
  func.func @transform_2(%arg0: i32, %arg1: i32) -> (i32, i32) {
    %c0_i32 = arith.constant 0 : i32
    %c0_i32_0 = arith.constant 0 : i32
    %c0_i32_1 = arith.constant 0 : i32
    return %c0_i32, %c0_i32_0 : i32, i32
  }
  func.func @transform_3(%arg0: i32, %arg1: i32) -> (i32, i32) {
    %c0_i32 = arith.constant 0 : i32
    %c0_i32_0 = arith.constant 0 : i32
    %c0_i32_1 = arith.constant 0 : i32
    return %c0_i32, %c0_i32_0 : i32, i32
  }
  func.func @transform_4(%arg0: i32, %arg1: i32) -> (i32, i32) {
    %c0_i32 = arith.constant 0 : i32
    %c0_i32_0 = arith.constant 0 : i32
    %c0_i32_1 = arith.constant 0 : i32
    return %c0_i32, %c0_i32_0 : i32, i32
  }
  func.func @transform_5(%arg0: i32, %arg1: i32) -> (i32, i32, i32) {
    %c0_i32 = arith.constant 0 : i32
    %c0_i32_0 = arith.constant 0 : i32
    return %arg0, %c0_i32, %arg1 : i32, i32, i32
  }
}

</mosaic_0001>

<llo_original>
// kernel: tpu_custom_call.1
$region0: #{tpu_custom_call.1}
  #allocation0 [shape = 'u32[]', space=smem, size = 0x4, offset = 0x4, fixed_abs, tag = 'smem constant byte address 0x4 - core index']
  #allocation1 [shape = 'u32[144,128]{1,0:T(1,128)}', space=vmem, size = 0x12000, scoped, tag = 'internal scratch']
  %s0 = inlined_call_operand.vmem [shape: f32[2,3,256], index: 0, kind: input, shape index: {}]
  %s1 = inlined_call_operand.vmem [shape: f32[32,3], index: 1, kind: input, shape index: {}]
  %s2 = inlined_call_operand.vmem [shape: f32[32,1], index: 2, kind: input, shape index: {}]
  %s3 = inlined_call_operand.vmem [shape: bf16[32,32], index: 3, kind: input, shape index: {}]
  %s4 = inlined_call_operand.vmem [shape: f32[32,1], index: 4, kind: input, shape index: {}]
  %s5 = inlined_call_operand.hbm [shape: f32[2,32,256], index: 5, kind: output, shape index: {}]
  %s6 = sld [smem:[#allocation0]]
  $region53: #{tpu_custom_call.1} parent=0
    _
  %s8 = ssub.s32 1, %s6
  %s9 = scalar_select 0, %s8, %s6
  $region1: #{tpu_custom_call.1} parent=0
    #allocation2 [shape = 'u8[65536]{0}', space=vmem, size = 0x10000, scoped, tag = 'output window, operand 0']
    #allocation3 [shape = 's32[2]{0}', space=sflag, size = 0x8, scoped, tag = 'scoped memory for tpu_custom_call.1']
    %10 = vsyncpa [#allocation3], 0
    %s11 = scalar_lea.sflag [#allocation3], 1
    %12 = vsyncpa %s11, 0
    loop: start=0, step=1, limit=4
    $region2: #{tpu_custom_call.1} parent=1 // loop_pre_header
      _
    $region3: #{tpu_custom_call.1} parent=1 // loop_header
      %s14 = sphi 0, %s18
      %p15 = scmp.ge.s32.totalorder %s14, 4
      %s21 = sphi 0, %s33
      %s22 = sphi 0, %s29
      %s23 = sphi 0, %s21
      %s24 = sphi 0, %s22
      %s25 = sphi 0, %s23
      %s26 = sphi 0, %s24
      %s38 = sphi 0, %s40
      %s41 = sphi 0, %s38
      %s42 = sphi 0, %s41
      %s58 = sphi 0, %s42
      %s62 = sphi 0, %s62
      %s64 = sphi 0, %s62
      %s65 = sphi 0, %s64
      %s79 = sphi 0, %s65
      %s83 = sphi 0, %s83
      %s85 = sphi 0, %s83
      %s86 = sphi 0, %s85
      %s100 = sphi 0, %s86
      %s104 = sphi 0, %s104
      %s106 = sphi 0, %s104
      %s107 = sphi 0, %s106
      %s121 = sphi 0, %s107
      %s125 = sphi 0, %s125
      %s127 = sphi 0, %s125
      %s128 = sphi 0, %s127
      %s142 = sphi 0, %s128
      %s150 = sphi 0, %s152
      %s153 = sphi 0, %s150
      %s154 = sphi 0, %s153
      %s170 = sphi 0, %s154
    $region4: #{tpu_custom_call.1} parent=1 // loop_header_branch
      %17 = sbr.rel (%p15) target = $region8
    $region5: #{tpu_custom_call.1} parent=1 // loop_body
      %s19 = ssub.s32 %s14, 1
      %s20 = ssub.s32 %s14, 2
      %s27 = sadd.s32 1, %s22
      %p28 = scmp.ge.s32.totalorder %s27, 1
      %s29 = scalar_select %p28, 0, %s27
      %s30 = sadd.s32 1, %s21
      %s31 = scalar_select %p28, %s30, %s21
      %p32 = scmp.ge.s32.totalorder %s31, 2
      %s33 = scalar_select %p32, 0, %s31
      %s34 = ssub.s32 %s21, %s33
      %s35 = ssub.s32 %s22, %s29
      %s36 = sor.u32 %s34, %s35
      %p37 = scmp.eq.s32.totalorder %s36, 0
      %s39 = sadd.s32 %s38, 1
      %s40 = scalar_select %p37, %s38, %s39
      %p43 = pneg %p37
      %p44 = scmp.eq.s32.totalorder %s14, 1
      %p45 = por %p43, %p44
      %p46 = scmp.ne.s32.totalorder %s38, %s41
      %p47 = scmp.eq.s32.totalorder %s14, 0
      %p48 = por %p46, %p47
      %p49 = scmp.ne.s32.totalorder %s38, %s41
      %p50 = scmp.eq.s32.totalorder %s19, 1
      %p51 = por %p49, %p50
      %p52 = scmp.ne.s32.totalorder %s41, %s42
      %p53 = scmp.eq.s32.totalorder %s19, 0
      %p54 = por %p52, %p53
      %p55 = scmp.ne.s32.totalorder %s41, %s42
      %p56 = scmp.eq.s32.totalorder %s20, 1
      %p57 = por %p55, %p56
      %p59 = scmp.ne.s32.totalorder %s42, %s58
      %p60 = scmp.eq.s32.totalorder %s20, 0
      %p61 = por %p59, %p60
      %s63 = sadd.s32 %s62, 1
      %p66 = scmp.eq.s32.totalorder %s14, 1
      %p67 = scmp.ne.s32.totalorder %s62, %s64
      %p68 = scmp.eq.s32.totalorder %s14, 0
      %p69 = por %p67, %p68
      %p70 = scmp.ne.s32.totalorder %s62, %s64
      %p71 = scmp.eq.s32.totalorder %s19, 1
      %p72 = por %p70, %p71
      %p73 = scmp.ne.s32.totalorder %s64, %s65
      %p74 = scmp.eq.s32.totalorder %s19, 0
      %p75 = por %p73, %p74
      %p76 = scmp.ne.s32.totalorder %s64, %s65
      %p77 = scmp.eq.s32.totalorder %s20, 1
      %p78 = por %p76, %p77
      %p80 = scmp.ne.s32.totalorder %s65, %s79
      %p81 = scmp.eq.s32.totalorder %s20, 0
      %p82 = por %p80, %p81
      %s84 = sadd.s32 %s83, 1
      %p87 = scmp.eq.s32.totalorder %s14, 1
      %p88 = scmp.ne.s32.totalorder %s83, %s85
      %p89 = scmp.eq.s32.totalorder %s14, 0
      %p90 = por %p88, %p89
      %p91 = scmp.ne.s32.totalorder %s83, %s85
      %p92 = scmp.eq.s32.totalorder %s19, 1
      %p93 = por %p91, %p92
      %p94 = scmp.ne.s32.totalorder %s85, %s86
      %p95 = scmp.eq.s32.totalorder %s19, 0
      %p96 = por %p94, %p95
      %p97 = scmp.ne.s32.totalorder %s85, %s86
      %p98 = scmp.eq.s32.totalorder %s20, 1
      %p99 = por %p97, %p98
      %p101 = scmp.ne.s32.totalorder %s86, %s100
      %p102 = scmp.eq.s32.totalorder %s20, 0
      %p103 = por %p101, %p102
      %s105 = sadd.s32 %s104, 1
      %p108 = scmp.eq.s32.totalorder %s14, 1
      %p109 = scmp.ne.s32.totalorder %s104, %s106
      %p110 = scmp.eq.s32.totalorder %s14, 0
      %p111 = por %p109, %p110
      %p112 = scmp.ne.s32.totalorder %s104, %s106
      %p113 = scmp.eq.s32.totalorder %s19, 1
      %p114 = por %p112, %p113
      %p115 = scmp.ne.s32.totalorder %s106, %s107
      %p116 = scmp.eq.s32.totalorder %s19, 0
      %p117 = por %p115, %p116
      %p118 = scmp.ne.s32.totalorder %s106, %s107
      %p119 = scmp.eq.s32.totalorder %s20, 1
      %p120 = por %p118, %p119
      %p122 = scmp.ne.s32.totalorder %s107, %s121
      %p123 = scmp.eq.s32.totalorder %s20, 0
      %p124 = por %p122, %p123
      %s126 = sadd.s32 %s125, 1
      %p129 = scmp.eq.s32.totalorder %s14, 1
      %p130 = scmp.ne.s32.totalorder %s125, %s127
      %p131 = scmp.eq.s32.totalorder %s14, 0
      %p132 = por %p130, %p131
      %p133 = scmp.ne.s32.totalorder %s125, %s127
      %p134 = scmp.eq.s32.totalorder %s19, 1
      %p135 = por %p133, %p134
      %p136 = scmp.ne.s32.totalorder %s127, %s128
      %p137 = scmp.eq.s32.totalorder %s19, 0
      %p138 = por %p136, %p137
      %p139 = scmp.ne.s32.totalorder %s127, %s128
      %p140 = scmp.eq.s32.totalorder %s20, 1
      %p141 = por %p139, %p140
      %p143 = scmp.ne.s32.totalorder %s128, %s142
      %p144 = scmp.eq.s32.totalorder %s20, 0
      %p145 = por %p143, %p144
      %s146 = ssub.s32 %s21, %s33
      %s147 = ssub.s32 %s22, %s29
      %s148 = sor.u32 %s146, %s147
      %p149 = scmp.eq.s32.totalorder %s148, 0
      %s151 = sadd.s32 %s150, 1
      %s152 = scalar_select %p149, %s150, %s151
      %p155 = pneg %p149
      %p156 = scmp.eq.s32.totalorder %s14, 1
      %p157 = por %p155, %p156
      %p158 = scmp.ne.s32.totalorder %s150, %s153
      %p159 = scmp.eq.s32.totalorder %s14, 0
      %p160 = por %p158, %p159
      %p161 = scmp.ne.s32.totalorder %s150, %s153
      %p162 = scmp.eq.s32.totalorder %s19, 1
      %p163 = por %p161, %p162
      %p164 = scmp.ne.s32.totalorder %s153, %s154
      %p165 = scmp.eq.s32.totalorder %s19, 0
      %p166 = por %p164, %p165
      %p167 = scmp.ne.s32.totalorder %s153, %s154
      %p168 = scmp.eq.s32.totalorder %s20, 1
      %p169 = por %p167, %p168
      %p171 = scmp.ne.s32.totalorder %s154, %s170
      %p172 = scmp.eq.s32.totalorder %s20, 0
      %p173 = por %p171, %p172
      %p174 = scmp.le.s32.totalorder 1, %s14
      %p175 = scmp.lt.s32.totalorder %s14, 3
      %p176 = pnand %p174, %p175
      %p177 = pneg %p176
      // Predicated region
      $region9: #{tpu_custom_call.1} parent=5 // pred_check
        _
      $region10: #{tpu_custom_call.1} parent=5 // pred_check_branch
        %179 = sbr.rel (%p176) target = $region12
      $region11: #{tpu_custom_call.1} parent=5 // pred_region
        %s180 = ssub.s32 %s14, 1
        // Predicated region
        $region13: #{tpu_custom_call.1} parent=11 // pred_check
          %p181 = pneg %p75
        $region14: #{tpu_custom_call.1} parent=11 // pred_check_branch
          %183 = sbr.rel (%p181) target = $region16
        $region15: #{tpu_custom_call.1} parent=11 // pred_region
          _
        $region16: #{tpu_custom_call.1} parent=11 // pred_fallthru
          _
        // Predicated region
        $region17: #{tpu_custom_call.1} parent=11 // pred_check
          %p184 = pneg %p96
        $region18: #{tpu_custom_call.1} parent=11 // pred_check_branch
          %186 = sbr.rel (%p184) target = $region20
        $region19: #{tpu_custom_call.1} parent=11 // pred_region
          _
        $region20: #{tpu_custom_call.1} parent=11 // pred_fallthru
          _
        // Predicated region
        $region21: #{tpu_custom_call.1} parent=11 // pred_check
          %p187 = pneg %p117
        $region22: #{tpu_custom_call.1} parent=11 // pred_check_branch
          %189 = sbr.rel (%p187) target = $region24
        $region23: #{tpu_custom_call.1} parent=11 // pred_region
          _
        $region24: #{tpu_custom_call.1} parent=11 // pred_fallthru
          _
        // Predicated region
        $region25: #{tpu_custom_call.1} parent=11 // pred_check
          %p190 = pneg %p138
        $region26: #{tpu_custom_call.1} parent=11 // pred_check_branch
          %192 = sbr.rel (%p190) target = $region28
        $region27: #{tpu_custom_call.1} parent=11 // pred_region
          _
        $region28: #{tpu_custom_call.1} parent=11 // pred_fallthru
          _
      $region12: #{tpu_custom_call.1} parent=5 // pred_fallthru
        _
      %p193 = scmp.lt.s32.totalorder %s14, 2
      // Predicated region
      $region29: #{tpu_custom_call.1} parent=5 // pred_check
        %p194 = pneg %p193
      $region30: #{tpu_custom_call.1} parent=5 // pred_check_branch
        %196 = sbr.rel (%p194) target = $region32
      $region31: #{tpu_custom_call.1} parent=5 // pred_region
        // Predicated region
        $region33: #{tpu_custom_call.1} parent=31 // pred_check
          %p197 = pneg %p48
        $region34: #{tpu_custom_call.1} parent=31 // pred_check_branch
          %199 = sbr.rel (%p197) target = $region36
        $region35: #{tpu_custom_call.1} parent=31 // pred_region
          %s200 = smul.u32 2, %s22
          %p201 = scmp.lt.s32.totalorder %s21, 1
          %s202 = scalar_select %p201, %s21, 1
          %p203 = scmp.lt.s32.totalorder %s200, 1
          %s204 = scalar_select %p203, %s200, 1
          %s205 = smul.addr %s202, 2
          %s206 = sadd.s32 %s204, %s205
          %s207 = smul.addr %s206, 4
          %s208 = scalar_lea.vmem %s0, %s207
          %s209 = smul.u32 2, %s22
        $region36: #{tpu_custom_call.1} parent=31 // pred_fallthru
          _
      $region32: #{tpu_custom_call.1} parent=5 // pred_fallthru
        _
      %p210 = scmp.le.s32.totalorder 1, %s14
      %p211 = scmp.lt.s32.totalorder %s14, 3
      %p212 = pnand %p210, %p211
      %p213 = pneg %p212
      // Predicated region
      $region37: #{tpu_custom_call.1} parent=5 // pred_check
        _
      $region38: #{tpu_custom_call.1} parent=5 // pred_check_branch
        %215 = sbr.rel (%p212) target = $region40
      $region39: #{tpu_custom_call.1} parent=5 // pred_region
        %s216 = ssub.s32 %s14, 1
        %s217 = smul.u32 2, %s24
        %p218 = scmp.lt.s32.totalorder %s23, 1
        %s219 = scalar_select %p218, %s23, 1
        %p220 = scmp.lt.s32.totalorder %s217, 1
        %s221 = scalar_select %p220, %s217, 1
        %s222 = smul.addr %s219, 2
        %s223 = sadd.s32 %s221, %s222
        %s224 = smul.addr %s223, 4
        %s225 = scalar_lea.vmem %s0, %s224
        %p226 = pneg %p54
        %p227 = pneg %p51
        %p228 = pneg %p75
        %p229 = pneg %p72
        %p230 = pneg %p96
        %p231 = pneg %p93
        %p232 = pneg %p117
        %p233 = pneg %p114
        %p234 = pneg %p138
        %p235 = pneg %p135
        %p236 = pneg %p166
        %p237 = pneg %p163
        %s238 = sand.u32 %s153, 1
        %s239 = scalar_lea.sflag [#allocation3], %s238
        %s240 = sand.u32 %s153, 1
        %s241 = smul.addr %s240, 64
        %s242 = scalar_lea.vmem [#allocation2], %s241
        %s243 = smul.u32 2, %s24
        %p244 = scmp.lt.s32.totalorder %s23, 1
        %s245 = scalar_select %p244, %s23, 1
        %p246 = scmp.lt.s32.totalorder %s243, 1
        %s247 = scalar_select %p246, %s243, 1
        %s248 = smul.addr %s245, 2
        %s249 = sadd.s32 %s247, %s248
        %s250 = smul.addr %s249, 4
        %s251 = scalar_lea.vmem %s0, %s250
        %s252 = smul.u32 2, %s24
        %s253 = smul.u32 2, %s24
        %v255 = vld [vmem:[%s251] sm:$0x77]
        %v256 = vld [vmem:[%s1] sm:$0xff]
        %v257 = vld [vmem:[%s1 + $0x8] sm:$0xff]
        %v258 = vld [vmem:[%s1 + $0x10] sm:$0xff]
        %v259 = vld [vmem:[%s1 + $0x18] sm:$0xff]
        %v260 = vld [vmem:[%s2] sm:$0xff]
        %v261 = vld [vmem:[%s2 + $0x8] sm:$0xff]
        %v262 = vld [vmem:[%s2 + $0x10] sm:$0xff]
        %v263 = vld [vmem:[%s2 + $0x18] sm:$0xff]
        %265 = vset.pattern.permute.xlu0 0
        %266 = vperm.xlu0 %265, %v256
        %v267 = vpop.permute.xlu0 %266
        %270 = vset.pattern.permute.xlu0 0
        %271 = vperm.xlu0 %270, %v257
        %v272 = vpop.permute.xlu0 %271
        %275 = vset.pattern.permute.xlu0 0
        %276 = vperm.xlu0 %275, %v258
        %v277 = vpop.permute.xlu0 %276
        %280 = vset.pattern.permute.xlu0 0
        %281 = vperm.xlu0 %280, %v259
        %v282 = vpop.permute.xlu0 %281
        %v285 = vlaneseq
        %v286 = vshrl.u32 %v285, 7
        %v287 = vsub.s32 0, %v286
        %v288 = vrot.slane %v255, %v287
        %v289 = vlaneseq
        %v290 = vshrl.u32 %v289, 7
        %v291 = vsub.s32 4, %v290
        %v292 = vrot.slane %v255, %v291
        %v295 = vlaneseq
        %v296 = vshrl.u32 %v295, 7
        %v297 = vsub.s32 0, %v296
        %v298 = vrot.slane %v288, %v297
        %v299 = vlaneseq
        %v300 = vshrl.u32 %v299, 7
        %v301 = vsub.s32 0, %v300
        %v302 = vrot.slane %v292, %v301
        %v303 = vmul.f32 %v267, %v298
        %v304 = vmul.f32 %v267, %v302
        %v305 = vmul.f32 %v272, %v298
        %v306 = vmul.f32 %v272, %v302
        %v307 = vmul.f32 %v277, %v298
        %v308 = vmul.f32 %v277, %v302
        %v309 = vmul.f32 %v282, %v298
        %v310 = vmul.f32 %v282, %v302
        %311 = vset.pattern.permute.xlu0 1
        %312 = vperm.xlu0 %311, %v256
        %v313 = vpop.permute.xlu0 %312
        %315 = vset.pattern.permute.xlu0 1
        %316 = vperm.xlu0 %315, %v257
        %v317 = vpop.permute.xlu0 %316
        %319 = vset.pattern.permute.xlu0 1
        %320 = vperm.xlu0 %319, %v258
        %v321 = vpop.permute.xlu0 %320
        %323 = vset.pattern.permute.xlu0 1
        %324 = vperm.xlu0 %323, %v259
        %v325 = vpop.permute.xlu0 %324
        %v327 = vlaneseq
        %v328 = vshrl.u32 %v327, 7
        %v329 = vsub.s32 1, %v328
        %v330 = vrot.slane %v255, %v329
        %v331 = vlaneseq
        %v332 = vshrl.u32 %v331, 7
        %v333 = vsub.s32 5, %v332
        %v334 = vrot.slane %v255, %v333
        %v337 = vlaneseq
        %v338 = vshrl.u32 %v337, 7
        %v339 = vsub.s32 1, %v338
        %v340 = vrot.slane %v330, %v339
        %v341 = vlaneseq
        %v342 = vshrl.u32 %v341, 7
        %v343 = vsub.s32 1, %v342
        %v344 = vrot.slane %v334, %v343
        %v345 = vmul.f32 %v313, %v340
        %v346 = vmul.f32 %v313, %v344
        %v347 = vmul.f32 %v317, %v340
        %v348 = vmul.f32 %v317, %v344
        %v349 = vmul.f32 %v321, %v340
        %v350 = vmul.f32 %v321, %v344
        %v351 = vmul.f32 %v325, %v340
        %v352 = vmul.f32 %v325, %v344
        %v353 = vadd.f32 %v303, %v345
        %v354 = vadd.f32 %v304, %v346
        %v355 = vadd.f32 %v305, %v347
        %v356 = vadd.f32 %v306, %v348
        %v357 = vadd.f32 %v307, %v349
        %v358 = vadd.f32 %v308, %v350
        %v359 = vadd.f32 %v309, %v351
        %v360 = vadd.f32 %v310, %v352
        %361 = vset.pattern.permute.xlu0 2
        %362 = vperm.xlu0 %361, %v256
        %v363 = vpop.permute.xlu0 %362
        %365 = vset.pattern.permute.xlu0 2
        %366 = vperm.xlu0 %365, %v257
        %v367 = vpop.permute.xlu0 %366
        %369 = vset.pattern.permute.xlu0 2
        %370 = vperm.xlu0 %369, %v258
        %v371 = vpop.permute.xlu0 %370
        %373 = vset.pattern.permute.xlu0 2
        %374 = vperm.xlu0 %373, %v259
        %v375 = vpop.permute.xlu0 %374
        %v377 = vlaneseq
        %v378 = vshrl.u32 %v377, 7
        %v379 = vsub.s32 2, %v378
        %v380 = vrot.slane %v255, %v379
        %v381 = vlaneseq
        %v382 = vshrl.u32 %v381, 7
        %v383 = vsub.s32 6, %v382
        %v384 = vrot.slane %v255, %v383
        %v387 = vlaneseq
        %v388 = vshrl.u32 %v387, 7
        %v389 = vsub.s32 2, %v388
        %v390 = vrot.slane %v380, %v389
        %v391 = vlaneseq
        %v392 = vshrl.u32 %v391, 7
        %v393 = vsub.s32 2, %v392
        %v394 = vrot.slane %v384, %v393
        %v395 = vmul.f32 %v363, %v390
        %v396 = vmul.f32 %v363, %v394
        %v397 = vmul.f32 %v367, %v390
        %v398 = vmul.f32 %v367, %v394
        %v399 = vmul.f32 %v371, %v390
        %v400 = vmul.f32 %v371, %v394
        %v401 = vmul.f32 %v375, %v390
        %v402 = vmul.f32 %v375, %v394
        %v403 = vadd.f32 %v353, %v395
        %v404 = vadd.f32 %v354, %v396
        %v405 = vadd.f32 %v355, %v397
        %v406 = vadd.f32 %v356, %v398
        %v407 = vadd.f32 %v357, %v399
        %v408 = vadd.f32 %v358, %v400
        %v409 = vadd.f32 %v359, %v401
        %v410 = vadd.f32 %v360, %v402
        %412 = vset.pattern.permute.xlu0 0
        %413 = vperm.xlu0 %412, %v260
        %v414 = vpop.permute.xlu0 %413
        %417 = vset.pattern.permute.xlu0 0
        %418 = vperm.xlu0 %417, %v261
        %v419 = vpop.permute.xlu0 %418
        %422 = vset.pattern.permute.xlu0 0
        %423 = vperm.xlu0 %422, %v262
        %v424 = vpop.permute.xlu0 %423
        %427 = vset.pattern.permute.xlu0 0
        %428 = vperm.xlu0 %427, %v263
        %v429 = vpop.permute.xlu0 %428
        %v431 = vadd.f32 %v403, %v414
        %v432 = vadd.f32 %v404, %v414
        %v433 = vadd.f32 %v405, %v419
        %v434 = vadd.f32 %v406, %v419
        %v435 = vadd.f32 %v407, %v424
        %v436 = vadd.f32 %v408, %v424
        %v437 = vadd.f32 %v409, %v429
        %v438 = vadd.f32 %v410, %v429
        %v439 = vmax.f32 %v431, 0.0
        %v440 = vmax.f32 %v432, 0.0
        %v441 = vmax.f32 %v433, 0.0
        %v442 = vmax.f32 %v434, 0.0
        %v443 = vmax.f32 %v435, 0.0
        %v444 = vmax.f32 %v436, 0.0
        %v445 = vmax.f32 %v437, 0.0
        %v446 = vmax.f32 %v438, 0.0
        %v447 = vld [vmem:[%s3] sm:$0xf]
        %v448 = vld [vmem:[%s3 + $0x4] sm:$0xf]
        %v449 = vld [vmem:[%s3 + $0x8] sm:$0xf]
        %v450 = vld [vmem:[%s3 + $0xc] sm:$0xf]
        %v451 = vpack.c.bf16 %v441, %v439
        %v452 = vpack.c.bf16 %v442, %v440
        %v453 = vpack.c.bf16 %v445, %v443
        %v454 = vpack.c.bf16 %v446, %v444
        %v455 = vld [vmem:[%s4] sm:$0xff]
        %v456 = vld [vmem:[%s4 + $0x8] sm:$0xff]
        %v457 = vld [vmem:[%s4 + $0x10] sm:$0xff]
        %v458 = vld [vmem:[%s4 + $0x18] sm:$0xff]
        %460 = vset.pattern.permute.xlu0 0
        %461 = vperm.xlu0 %460, %v455
        %v462 = vpop.permute.xlu0 %461
        %465 = vset.pattern.permute.xlu0 0
        %466 = vperm.xlu0 %465, %v456
        %v467 = vpop.permute.xlu0 %466
        %470 = vset.pattern.permute.xlu0 0
        %471 = vperm.xlu0 %470, %v457
        %v472 = vpop.permute.xlu0 %471
        %475 = vset.pattern.permute.xlu0 0
        %476 = vperm.xlu0 %475, %v458
        %v477 = vpop.permute.xlu0 %476
        %v483 = vunpack.c.l.b16 %v447
        %v484 = vunpack.c.l.b16 %v448
        %v485 = vunpack.c.l.b16 %v449
        %v486 = vunpack.c.l.b16 %v450
        %v487 = vpack.c.b16 %v484, %v483
        %v488 = vpack.c.b16 %v486, %v485
        %vm489 = vcmask 261120
        %v491 = vsel %vm489, %v487, 0
        %v494 = vsel %vm489, %v488, 0
        %496 = vmatprep.subr.bf16.mxu0 0
        %497 = vmatpush1.bf16.msra.mxu0 0
        %498 = vmatprep.subr.bf16.mxu0 0
        %499 = vmatpush1.bf16.msra.mxu0 0
        %500 = vmatprep.subr.bf16.mxu0 0
        %501 = vmatpush1.bf16.msra.mxu0 0
        %502 = vmatprep.subr.bf16.mxu0 0
        %503 = vmatpush1.bf16.msra.mxu0 0
        %504 = vmatprep.subr.bf16.mxu0 0
        %505 = vmatpush1.bf16.msra.mxu0 0
        %506 = vmatprep.subr.bf16.mxu0 0
        %507 = vmatpush1.bf16.msra.mxu0 0
        %508 = vmatprep.subr.bf16.mxu0 %v454
        %509 = vmatpush1.bf16.msra.mxu0 %v453
        %510 = vmatprep.subr.bf16.mxu0 %v452
        %511 = vmatpush1.bf16.msra.mxu0 %v451
        %512 = vmatprep.subr.bf16.mxu0 0
        %513 = vmatpush2.bf16.msra.mxu0 0
        %514 = vmatprep.subr.bf16.mxu0 0
        %515 = vmatpush2.bf16.msra.mxu0 0
        %516 = vmatprep.subr.bf16.mxu0 0
        %517 = vmatpush2.bf16.msra.mxu0 0
        %518 = vmatprep.subr.bf16.mxu0 0
        %519 = vmatpush2.bf16.msra.mxu0 0
        %520 = vmatprep.subr.bf16.mxu0 0
        %521 = vmatpush2.bf16.msra.mxu0 0
        %522 = vmatprep.subr.bf16.mxu0 0
        %523 = vmatpush2.bf16.msra.mxu0 0
        %524 = vmatprep.subr.bf16.mxu0 0
        %525 = vmatpush2.bf16.msra.mxu0 0
        %526 = vmatprep.subr.bf16.mxu0 0
        %527 = vmatpush2.bf16.msra.mxu0 0
        %528 = vmatprep.mubr.bf16.mxu0 0
        %529 = vmatmul.mubr.bf16.gmra.mxu0 %v491
        %v530 = vpop.f32.mrf.mxu0
        %v531 = vadd.f32 %v462, %v530
        %v532 = vpop.f32.mrf.mxu0
        %v533 = vadd.f32 %v462, %v532
        %v534 = vpop.f32.mrf.mxu0
        %v535 = vadd.f32 %v467, %v534
        %v536 = vpop.f32.mrf.mxu0
        %v537 = vadd.f32 %v467, %v536
        %538 = vmatprep.mubr.bf16.mxu0 0
        %539 = vmatmul.mubr.bf16.gmra.mxu0 %v494
        %v540 = vpop.f32.mrf.mxu0
        %v541 = vadd.f32 %v472, %v540
        %v542 = vpop.f32.mrf.mxu0
        %v543 = vadd.f32 %v472, %v542
        %v544 = vpop.f32.mrf.mxu0
        %v545 = vadd.f32 %v477, %v544
        %v546 = vpop.f32.mrf.mxu0
        %v547 = vadd.f32 %v477, %v546
        %548 = vdwg.mxu0
        %549 = vst [vmem:[%s242] sm:$0xff] %v531
        %550 = vst [vmem:[%s242 + $0x8] sm:$0xff] %v533
        %551 = vst [vmem:[%s242 + $0x10] sm:$0xff] %v535
        %552 = vst [vmem:[%s242 + $0x18] sm:$0xff] %v537
        %553 = vst [vmem:[%s242 + $0x20] sm:$0xff] %v541
        %554 = vst [vmem:[%s242 + $0x28] sm:$0xff] %v543
        %555 = vst [vmem:[%s242 + $0x30] sm:$0xff] %v545
        %556 = vst [vmem:[%s242 + $0x38] sm:$0xff] %v547
        %s557 = sand.u32 %s153, 1
        %s558 = scalar_lea.sflag [#allocation3], %s557
        %s559 = sand.u32 %s153, 1
        %s560 = smul.addr %s559, 64
        %s561 = scalar_lea.vmem [#allocation2], %s560
        // Predicated region
        $region41: #{tpu_custom_call.1} parent=39 // pred_check
          %p562 = pneg %p163
        $region42: #{tpu_custom_call.1} parent=39 // pred_check_branch
          %564 = sbr.rel (%p562) target = $region44
        $region43: #{tpu_custom_call.1} parent=39 // pred_region
          %s565 = smul.u32 2, %s24
          %s567 = ssub.s32 1024, 1024
          %568 = vsyncadd %s558, %s567
          %s569 = smul.addr %s23, 8
          %s570 = sadd.s32 %s565, %s569
          %s571 = smul.addr %s570, 128
          %s572 = scalar_lea.hbm %s5, %s571
          %s573 = sshll.u32 %s561, 4
          %s574 = int_to_ptr.vmem [resolvable:$true] %s573
          %579 = dma.vmem_to_hbm [thread:$0]  %s574, 1024, %s572, %s558, 256, 256, 16
        $region44: #{tpu_custom_call.1} parent=39 // pred_fallthru
          _
      $region40: #{tpu_custom_call.1} parent=5 // pred_fallthru
        _
      %p580 = scmp.le.s32.totalorder 2, %s14
      // Predicated region
      $region45: #{tpu_custom_call.1} parent=5 // pred_check
        %p581 = pneg %p580
      $region46: #{tpu_custom_call.1} parent=5 // pred_check_branch
        %583 = sbr.rel (%p581) target = $region48
      $region47: #{tpu_custom_call.1} parent=5 // pred_region
        %s584 = ssub.s32 %s14, 2
        // Predicated region
        $region49: #{tpu_custom_call.1} parent=47 // pred_check
          %p585 = pneg %p169
        $region50: #{tpu_custom_call.1} parent=47 // pred_check_branch
          %587 = sbr.rel (%p585) target = $region52
        $region51: #{tpu_custom_call.1} parent=47 // pred_region
          %s588 = sand.u32 %s154, 1
          %s589 = scalar_lea.sflag [#allocation3], %s588
          %s590 = sand.u32 %s154, 1
          %s591 = smul.addr %s590, 64
          %s592 = scalar_lea.vmem [#allocation2], %s591
          %593 = dma.done %s589, 1024
        $region52: #{tpu_custom_call.1} parent=47 // pred_fallthru
          _
      $region48: #{tpu_custom_call.1} parent=5 // pred_fallthru
        _
    $region6: #{tpu_custom_call.1} parent=1 // loop_footer
      %s18 = sadd.s32 1, %s14
    $region7: #{tpu_custom_call.1} parent=1 // loop_footer_branch
      %13 = sbr.rel target = $region3
    $region8: #{tpu_custom_call.1} parent=1 // loop_exit
      _
    %594 = vsyncpa [#allocation3], 1
    %s595 = scalar_lea.sflag [#allocation3], 1
    %596 = vsyncpa %s595, 1

</llo_original>
